<compile_context>
chip_gen: v6e
topology: v6e:2x2x1
jax: 0.10.0
libtpu: 0.0.40
codegen_flags: <defaults>
</compile_context>

<pallas_src>
import jax
import jax.numpy as jnp
from jax import lax
from jax.experimental import pallas as pl
from jax.experimental.pallas import tpu as pltpu


def _tpu_defaults():
    """Best-effort trace-time hardware query; never raises."""
    vmem_cap = None
    n_cores = None
    try:
        info = pltpu.get_tpu_info()
        vmem_cap = getattr(info, "vmem_capacity_bytes", None)
        for name in ("num_tensorcores", "tensorcores_per_chip", "num_cores",
                     "core_count"):
            v = getattr(info, name, None)
            if isinstance(v, int) and v > 0:
                n_cores = v
                break
    except Exception:
        pass
    return vmem_cap, n_cores


def _make_mae_kernel(*, rows, block_rows, lanes, n_inner, group_rows,
                     needs_mask):
    """Builds the kernel; all tiling parameters are static Python ints."""
    n_groups = block_rows // group_rows
    unroll = True if n_groups <= 8 else 8

    def kernel(yh_ref, y_ref, o_ref):
        # o_ref: (8, lanes) f32 output block, revisited across the inner
        # (reduction) grid axis -> this part's resident accumulator.
        @pl.when(pl.program_id(1) == 0)
        def _():
            o_ref[...] = jnp.zeros_like(o_ref)

        if needs_mask:
            # Global block index (unclamped, so trailing "virtual" blocks that
            # only exist to even out the parts split get valid <= 0 and are
            # masked to exactly zero; their DMA re-reads the clamped last
            # block, which is at most one redundant block per part).
            b = pl.program_id(0) * n_inner + pl.program_id(1)
            valid = rows - b * block_rows   # number of real rows in this block

        def body(g, acc):
            start = pl.multiple_of(g * group_rows, group_rows)
            a = yh_ref[pl.ds(start, group_rows), :].astype(jnp.float32)
            t = y_ref[pl.ds(start, group_rows), :].astype(jnp.float32)
            d = jnp.abs(a - t)
            if needs_mask:
                row = g * group_rows + lax.broadcasted_iota(
                    jnp.int32, (group_rows, lanes), 0)
                d = jnp.where(row < valid, d, 0.0)
            # Fold sublane-tile groups into the (8, lanes) accumulator:
            # free reshape (splits along (8,128) tile boundaries) + VPU adds.
            return acc + d.reshape(group_rows // 8, 8, lanes).sum(axis=0)

        acc = lax.fori_loop(0, n_groups, body,
                            jnp.zeros((8, lanes), jnp.float32), unroll=unroll)
        o_ref[...] += acc

    return kernel


def mae_loss(y_hat, y, *, lanes=None, block_rows=None, num_parts=None,
             vmem_limit_bytes=28 * 1024 * 1024, min_pallas_numel=1 << 20):
    assert y_hat.shape == y.shape, "MAELoss requires matching shapes"
    total = int(y_hat.size)

    def _xla_path():
        # Fused abs-diff-mean: reads each input exactly once from HBM, which
        # is already bandwidth-optimal for this trivially fusible reduction.
        return jnp.mean(jnp.abs(y_hat.astype(jnp.float32) -
                                y.astype(jnp.float32)))

    if total == 0 or total < min_pallas_numel:
        return _xla_path()

    item_a = jnp.dtype(y_hat.dtype).itemsize
    item_b = jnp.dtype(y.dtype).itemsize
    itemsize = max(item_a, item_b)
    # Dtype-aware sublane multiple: 8 rows (f32), 16 (bf16), 32 (int8/fp8).
    sub_mult = max(8, 32 // min(item_a, item_b))

    # Lane width: largest multiple of 128 dividing numel with >= one sublane
    # tile of rows.  No padding is ever introduced (a jnp.pad would
    # materialize a full HBM copy of both inputs).
    if lanes is None:
        for cand in (512, 256, 128):
            if total % cand == 0 and (total // cand) >= sub_mult:
                lanes = cand
                break
    if lanes is None or lanes % 128 != 0 or total % lanes != 0:
        return _xla_path()      # numel not 128-aligned: fused XLA, no pad copy
    rows = total // lanes
    if rows < sub_mult:
        return _xla_path()

    # Block rows: ~4 MiB per input block (amortizes the ~0.35us per-grid-step
    # overhead even at v7x HBM speed), dtype-aware sublane rounding, capped to
    # the rounded-down row count.
    if block_rows is None:
        block_rows = (4 << 20) // (lanes * itemsize)
    block_rows = max(sub_mult, (int(block_rows) // sub_mult) * sub_mult)
    cap = max(sub_mult, (rows // sub_mult) * sub_mult)
    block_rows = min(block_rows, cap)

    big_group = sub_mult * 8
    if block_rows >= big_group:
        block_rows = (block_rows // big_group) * big_group
        group_rows = big_group
    else:
        group_rows = sub_mult

    n_blocks = pl.cdiv(rows, block_rows)

    vmem_cap, n_cores = _tpu_defaults()
    if num_parts is None:
        num_parts = n_cores if n_cores is not None else 2   # v7x: 2 TCs
    num_parts = max(1, min(int(num_parts), n_blocks))
    n_inner = pl.cdiv(n_blocks, num_parts)

    needs_mask = (rows % block_rows != 0) or (num_parts * n_inner != n_blocks)

    if vmem_cap is not None:
        vmem_limit_bytes = min(int(vmem_limit_bytes),
                               max(16 << 20, int(vmem_cap) - (8 << 20)))

    # Free reshapes of the contiguous inputs: no pad, no copy.
    yh2 = y_hat.reshape(rows, lanes)
    y2 = y.reshape(rows, lanes)

    kernel = _make_mae_kernel(rows=rows, block_rows=block_rows, lanes=lanes,
                              n_inner=n_inner, group_rows=group_rows,
                              needs_mask=needs_mask)

    last_block = n_blocks - 1

    def in_map(p, i):
        # Clamp virtual trailing blocks (uneven part split); the kernel masks
        # their contribution to exactly zero.
        return (jnp.minimum(p * n_inner + i, last_block), 0)

    cost = pl.CostEstimate(
        flops=3 * total,
        transcendentals=0,
        bytes_accessed=total * (item_a + item_b) + num_parts * 8 * lanes * 4,
    )

    partials = pl.pallas_call(
        kernel,
        out_shape=jax.ShapeDtypeStruct((num_parts * 8, lanes), jnp.float32),
        grid_spec=pltpu.PrefetchScalarGridSpec(
            num_scalar_prefetch=0,
            grid=(num_parts, n_inner),
            in_specs=[
                pl.BlockSpec((block_rows, lanes), in_map),
                pl.BlockSpec((block_rows, lanes), in_map),
            ],
            out_specs=pl.BlockSpec((8, lanes), lambda p, i: (p, 0)),
        ),
        compiler_params=pltpu.CompilerParams(
            dimension_semantics=("parallel", "arbitrary"),
            vmem_limit_bytes=int(vmem_limit_bytes),
        ),
        cost_estimate=cost,
    )(yh2, y2)

    # One final cross-lane reduce + mean scaling, done once in the wrapper.
    return jnp.sum(partials) / jnp.float32(total)


if __name__ == "__main__":
    key = jax.random.PRNGKey(0)
    k1, k2, k3, k4, k5, k6 = jax.random.split(key, 6)

    def check(a, b, **kw):
        loss = mae_loss(a, b, **kw)
        jax.block_until_ready(loss)
        ref = jnp.mean(jnp.abs(a - b))
        assert jnp.allclose(loss, ref, rtol=1e-4, atol=1e-6), (loss, ref)

    # 1) Small NCHW prediction/target pair (numel 128-aligned -> Pallas path,
    #    forced despite the small size so the kernel itself is exercised).
    yh = jax.random.normal(k1, (2, 4, 16, 16), dtype=jnp.float32)
    yt = jax.random.normal(k2, (2, 4, 16, 16), dtype=jnp.float32)
    check(yh, yt, min_pallas_numel=0)

    # 2) Exercises the masked partial last row-block, a 2-part split with an
    #    odd block count (clamped virtual block) and multi-step inner
    #    reduction -- all with zero padding copies.
    yh = jax.random.normal(k3, (6, 4, 19, 128), dtype=jnp.float32)
    yt = jax.random.normal(k4, (6, 4, 19, 128), dtype=jnp.float32)
    check(yh, yt, block_rows=8, num_parts=2, min_pallas_numel=0)

    # 3) Default large-tile configuration (4 MiB input blocks) on a bigger
    #    tensor (>= 1M elements so the Pallas path is taken by default).
    yh = jax.random.normal(k5, (4, 8, 256, 256), dtype=jnp.float32)
    yt = jax.random.normal(k6, (4, 8, 256, 256), dtype=jnp.float32)
    check(yh, yt)

    # 4) numel not a multiple of 128 -> fused-XLA fallback (no pad copy).
    yh = jax.random.normal(k1, (8, 5, 17, 93), dtype=jnp.float32)
    yt = jax.random.normal(k2, (8, 5, 17, 93), dtype=jnp.float32)
    check(yh, yt, min_pallas_numel=0)

    print("KERNEL_OK")
</pallas_src>

<mosaic_0001>
module attributes {stable_mosaic.version = 11 : i64} {
  func.func @kernel(%arg0: i32, %arg1: i32, %arg2: memref<8x256xf32, #tpu.memory_space<vmem>>, %arg3: memref<8x256xf32, #tpu.memory_space<vmem>>, %arg4: memref<8x256xf32, #tpu.memory_space<vmem>>) attributes {dimension_semantics = [#tpu.dimension_semantics<parallel>, #tpu.dimension_semantics<arbitrary>], iteration_bounds = array<i64: 1, 1>, scalar_prefetch = 0 : i64, scratch_operands = 0 : i64, tpu.core_type = #tpu.core_type<tc>, window_params = [{transform_indices = @transform_0, window_bounds = array<i64: 8, 256>}, {transform_indices = @transform_1, window_bounds = array<i64: 8, 256>}, {transform_indices = @transform_2, window_bounds = array<i64: 8, 256>}]} {
    %c0_i32 = arith.constant 0 : i32
    %0 = arith.cmpi eq, %arg1, %c0_i32 : i32
    %1 = arith.extui %0 : i1 to i32
    %c0_i32_0 = arith.constant 0 : i32
    %2 = arith.cmpi ne, %1, %c0_i32_0 : i32
    scf.if %2 {
      %cst_8 = arith.constant 0.000000e+00 : f32
      %18 = vector.broadcast %cst_8 : f32 to vector<8x256xf32>
      %c0_9 = arith.constant 0 : index
      %c0_10 = arith.constant 0 : index
      %19 = vector.load %arg4[%c0_9, %c0_10] : memref<8x256xf32, #tpu.memory_space<vmem>>, vector<8x256xf32>
      tpu.vector_store %arg4[%c0_9, %c0_10], %18 {strides = array<i32>} : memref<8x256xf32, #tpu.memory_space<vmem>>, vector<8x256xf32>,
    } else {
    }
    %cst = arith.constant 0.000000e+00 : f32
    %3 = vector.broadcast %cst : f32 to vector<8x256xf32>
    %c0_i32_1 = arith.constant 0 : i32
    %c8_i32 = arith.constant 8 : i32
    %4 = arith.muli %c0_i32_1, %c8_i32 : i32
    %5 = tpu.assume_multiple %4, 8 : i32
    %6 = arith.index_cast %5 : i32 to index
    %c0 = arith.constant 0 : index
    %7 = vector.load %arg2[%6, %c0] : memref<8x256xf32, #tpu.memory_space<vmem>>, vector<8x256xf32>
    %8 = arith.index_cast %5 : i32 to index
    %c0_2 = arith.constant 0 : index
    %9 = vector.load %arg3[%8, %c0_2] : memref<8x256xf32, #tpu.memory_space<vmem>>, vector<8x256xf32>
    %10 = arith.subf %7, %9 : vector<8x256xf32>
    %11 = math.absf %10 : vector<8x256xf32>
    %12 = vector.shape_cast %11 : vector<8x256xf32> to vector<1x8x256xf32>
    %cst_3 = arith.constant dense<0.000000e+00> : vector<8x256xf32>
    %13 = vector.multi_reduction <add>, %12, %cst_3 [0] : vector<1x8x256xf32> to vector<8x256xf32>
    %14 = arith.addf %3, %13 : vector<8x256xf32>
    %c1_i32 = arith.constant 1 : i32
    %c0_4 = arith.constant 0 : index
    %c0_5 = arith.constant 0 : index
    %15 = vector.load %arg4[%c0_4, %c0_5] : memref<8x256xf32, #tpu.memory_space<vmem>>, vector<8x256xf32>
    %16 = arith.addf %15, %14 : vector<8x256xf32>
    %c0_6 = arith.constant 0 : index
    %c0_7 = arith.constant 0 : index
    %17 = vector.load %arg4[%c0_6, %c0_7] : memref<8x256xf32, #tpu.memory_space<vmem>>, vector<8x256xf32>
    tpu.vector_store %arg4[%c0_6, %c0_7], %16 {strides = array<i32>} : memref<8x256xf32, #tpu.memory_space<vmem>>, vector<8x256xf32>,
    return
  }
  func.func @transform_0(%arg0: i32, %arg1: i32) -> (i32, i32) {
    %c1_i32 = arith.constant 1 : i32
    %0 = arith.muli %arg0, %c1_i32 : i32
    %1 = arith.addi %0, %arg1 : i32
    %c0_i32 = arith.constant 0 : i32
    %2 = arith.minsi %1, %c0_i32 : i32
    %c0_i32_0 = arith.constant 0 : i32
    %c0_i32_1 = arith.constant 0 : i32
    return %2, %c0_i32_0 : i32, i32
  }
  func.func @transform_1(%arg0: i32, %arg1: i32) -> (i32, i32) {
    %c1_i32 = arith.constant 1 : i32
    %0 = arith.muli %arg0, %c1_i32 : i32
    %1 = arith.addi %0, %arg1 : i32
    %c0_i32 = arith.constant 0 : i32
    %2 = arith.minsi %1, %c0_i32 : i32
    %c0_i32_0 = arith.constant 0 : i32
    %c0_i32_1 = arith.constant 0 : i32
    return %2, %c0_i32_0 : i32, i32
  }
  func.func @transform_2(%arg0: i32, %arg1: i32) -> (i32, i32) {
    %c0_i32 = arith.constant 0 : i32
    %c0_i32_0 = arith.constant 0 : i32
    return %arg0, %c0_i32 : i32, i32
  }
}

</mosaic_0001>

<llo_original>
// kernel: tpu_custom_call.1
$region0: #{tpu_custom_call.1}
  #allocation0 [shape = 'u32[]', space=smem, size = 0x4, offset = 0x4, fixed_abs, tag = 'smem constant byte address 0x4 - core index']
  #allocation1 [shape = 'u32[144,128]{1,0:T(1,128)}', space=vmem, size = 0x12000, scoped, tag = 'internal scratch']
  %s0 = inlined_call_operand.hbm [shape: f32[8,256], index: 0, kind: input, shape index: {}]
  %s1 = inlined_call_operand.hbm [shape: f32[8,256], index: 1, kind: input, shape index: {}]
  %s2 = inlined_call_operand.hbm [shape: f32[8,256], index: 2, kind: output, shape index: {}]
  %s3 = sld [smem:[#allocation0]]
  $region30: #{tpu_custom_call.1} parent=0
    _
  %s5 = ssub.s32 1, %s3
  %s6 = scalar_select 0, %s5, %s3
  $region1: #{tpu_custom_call.1} parent=0
    #allocation2 [shape = 'u8[8192]{0}', space=vmem, size = 0x2000, scoped, tag = 'input window, operand 0, single buffered']
    #allocation3 [shape = 's32[1]{0}', space=sflag, size = 0x4, scoped, tag = 'scoped memory for tpu_custom_call.1']
    #allocation4 [shape = 's32[1]{0}', space=sflag, size = 0x4, scoped, tag = 'scoped memory for tpu_custom_call.1']
    #allocation5 [shape = 'u8[8192]{0}', space=vmem, size = 0x2000, scoped, tag = 'input window, operand 1, single buffered']
    #allocation6 [shape = 's32[1]{0}', space=sflag, size = 0x4, scoped, tag = 'scoped memory for tpu_custom_call.1']
    #allocation7 [shape = 'u8[8192]{0}', space=vmem, size = 0x2000, scoped, tag = 'output window, operand 0, single buffered']
    %7 = vsyncpa [#allocation3], 0
    %8 = vsyncpa [#allocation6], 0
    %9 = vsyncpa [#allocation4], 0
    // Predicated region
    $region2: #{tpu_custom_call.1} parent=1 // pred_check
      _
    $region3: #{tpu_custom_call.1} parent=1 // pred_check_branch
      %11 = sbr.rel (0) target = $region5
    $region4: #{tpu_custom_call.1} parent=1 // pred_region
      %s12 = sadd.s32 0, 0
      %p13 = scmp.lt.s32.totalorder %s12, 0
      %s14 = scalar_select %p13, %s12, 0
      %s16 = ssub.s32 256, 256
      %17 = vsyncadd [#allocation3], %s16
      %s18 = smul.addr %s14, 2
      %s19 = smul.addr %s18, 128
      %s20 = scalar_lea.hbm %s0, %s19
      %s22 = sshll.u32 [#allocation2], 4
      %s23 = int_to_ptr.vmem [resolvable:$true] %s22
      %25 = dma.hbm_to_vmem [thread:$0]  %s20, 256, %s23, [#allocation3]
    $region5: #{tpu_custom_call.1} parent=1 // pred_fallthru
      _
    // Predicated region
    $region6: #{tpu_custom_call.1} parent=1 // pred_check
      _
    $region7: #{tpu_custom_call.1} parent=1 // pred_check_branch
      %27 = sbr.rel (0) target = $region9
    $region8: #{tpu_custom_call.1} parent=1 // pred_region
      %s28 = sadd.s32 0, 0
      %p29 = scmp.lt.s32.totalorder %s28, 0
      %s30 = scalar_select %p29, %s28, 0
      %s32 = ssub.s32 256, 256
      %33 = vsyncadd [#allocation6], %s32
      %s34 = smul.addr %s30, 2
      %s35 = smul.addr %s34, 128
      %s36 = scalar_lea.hbm %s1, %s35
      %s38 = sshll.u32 [#allocation5], 4
      %s39 = int_to_ptr.vmem [resolvable:$true] %s38
      %41 = dma.hbm_to_vmem [thread:$0]  %s36, 256, %s39, [#allocation6]
    $region9: #{tpu_custom_call.1} parent=1 // pred_fallthru
      _
    // Predicated region
    $region10: #{tpu_custom_call.1} parent=1 // pred_check
      _
    $region11: #{tpu_custom_call.1} parent=1 // pred_check_branch
      %43 = sbr.rel (0) target = $region13
    $region12: #{tpu_custom_call.1} parent=1 // pred_region
      %44 = dma.done [#allocation3], 256
    $region13: #{tpu_custom_call.1} parent=1 // pred_fallthru
      _
    // Predicated region
    $region14: #{tpu_custom_call.1} parent=1 // pred_check
      _
    $region15: #{tpu_custom_call.1} parent=1 // pred_check_branch
      %46 = sbr.rel (0) target = $region17
    $region16: #{tpu_custom_call.1} parent=1 // pred_region
      %47 = dma.done [#allocation6], 256
    $region17: #{tpu_custom_call.1} parent=1 // pred_fallthru
      _
    %s48 = sadd.s32 0, 0
    %p49 = scmp.lt.s32.totalorder %s48, 0
    %s50 = scalar_select %p49, %s48, 0
    %s51 = sadd.s32 0, 0
    %p52 = scmp.lt.s32.totalorder %s51, 0
    %s53 = scalar_select %p52, %s51, 0
    %p54 = scmp.eq.s32.totalorder 0, 0
    // Predicated region
    $region18: #{tpu_custom_call.1} parent=1 // pred_check
      %p55 = pneg %p54
    $region19: #{tpu_custom_call.1} parent=1 // pred_check_branch
      %57 = sbr.rel (%p55) target = $region21
    $region20: #{tpu_custom_call.1} parent=1 // pred_region
      %58 = vst [vmem:[#allocation7] sm:$0xff] 0.0
      %59 = vst [vmem:[#allocation7 + $0x8] sm:$0xff] 0.0
    $region21: #{tpu_custom_call.1} parent=1 // pred_fallthru
      _
    %s60 = smul.u32 0, 2
    %s61 = smul.addr %s60, 8
    %s62 = scalar_lea.vmem [#allocation2], %s61
    %v63 = vld [vmem:[%s62] sm:$0xff]
    %v64 = vld [vmem:[%s62 + $0x8] sm:$0xff]
    %s65 = smul.addr %s60, 8
    %s66 = scalar_lea.vmem [#allocation5], %s65
    %v67 = vld [vmem:[%s66] sm:$0xff]
    %v68 = vld [vmem:[%s66 + $0x8] sm:$0xff]
    %v69 = vsub.f32 %v63, %v67
    %v70 = vsub.f32 %v64, %v68
    %v71 = vand.u32 2147483647, %v69
    %v72 = vand.u32 2147483647, %v70
    %v73 = vadd.f32 %v71, 0.0
    %v74 = vadd.f32 %v72, 0.0
    %v75 = vadd.f32 %v73, 0.0
    %v76 = vadd.f32 %v74, 0.0
    %v77 = vld [vmem:[#allocation7] sm:$0xff]
    %v78 = vld [vmem:[#allocation7 + $0x8] sm:$0xff]
    %v79 = vadd.f32 %v77, %v75
    %v80 = vadd.f32 %v78, %v76
    %81 = vst [vmem:[#allocation7] sm:$0xff] %v79
    %82 = vst [vmem:[#allocation7 + $0x8] sm:$0xff] %v80
    // Predicated region
    $region22: #{tpu_custom_call.1} parent=1 // pred_check
      _
    $region23: #{tpu_custom_call.1} parent=1 // pred_check_branch
      %84 = sbr.rel (0) target = $region25
    $region24: #{tpu_custom_call.1} parent=1 // pred_region
      %s86 = ssub.s32 256, 256
      %87 = vsyncadd [#allocation4], %s86
      %s89 = sshll.u32 [#allocation7], 4
      %s90 = int_to_ptr.vmem [resolvable:$true] %s89
      %92 = dma.vmem_to_hbm [thread:$0]  %s90, 256, %s2, [#allocation4]
    $region25: #{tpu_custom_call.1} parent=1 // pred_fallthru
      _
    // Predicated region
    $region26: #{tpu_custom_call.1} parent=1 // pred_check
      _
    $region27: #{tpu_custom_call.1} parent=1 // pred_check_branch
      %94 = sbr.rel (0) target = $region29
    $region28: #{tpu_custom_call.1} parent=1 // pred_region
      %95 = dma.done [#allocation4], 256
    $region29: #{tpu_custom_call.1} parent=1 // pred_fallthru
      _
    %96 = vsyncpa [#allocation3], 1
    %97 = vsyncpa [#allocation6], 1
    %98 = vsyncpa [#allocation4], 1

</llo_original>
